<compile_context>
chip_gen: v5e
topology: v5e:2x2
jax: 0.10.0
libtpu: 0.0.40
codegen_flags: <defaults>
</compile_context>

<pallas_src>
import functools
import math

import jax
import jax.numpy as jnp
from jax.experimental import pallas as pl
from jax.experimental.pallas import tpu as pltpu


# ----------------------------- fused Pallas kernel ---------------------------
def _gcn_fused_kernel(x_ref, adjb_ref, w_ref, b_ref, out_ref, *, layer_meta):
    """Runs every GCN layer back-to-back on VMEM-resident data.

    x_ref      : (B*N, Fmax)      input node features (batch folded into rows,
                                  channel-padded to Fmax)
    adjb_ref   : (B*N, B*N)       block-diagonal adjacency kron(I_B, adj)
    w_ref      : (L, Fmax, Fmax)  stacked, zero-padded layer weights
    b_ref      : (L, 1, Fmax)     stacked, zero-padded layer biases
    out_ref    : (B*N, Fmax)      final-layer output (padded channels are 0)
    layer_meta : static tuple of (length, do_cut, do_relu) per layer
    """
    adj_blk = adjb_ref[...]                                   # (B*N, B*N)
    feats = x_ref[...].astype(jnp.float32)                    # (B*N, Fmax)

    # Hoisted once: all (padded) layers share this shape; JAX does not CSE
    # broadcast_in_dim, so keeping it in the loop would emit one per layer.
    col = jax.lax.broadcasted_iota(jnp.int32, feats.shape, 1)  # (B*N, Fmax)

    for li, (length, do_cut, do_relu) in enumerate(layer_meta):
        w = w_ref[li]                                          # (Fmax, Fmax)
        bias = b_ref[li]                                       # (1, Fmax)

        # Node-feature projection: one MXU matmul over the whole batch.
        h = jnp.dot(feats, w, preferred_element_type=jnp.float32)

        # Graph aggregation: one block-diagonal MXU matmul over the whole
        # batch (no per-batch loop, no concat copies).
        agg = jnp.dot(adj_blk, h, preferred_element_type=jnp.float32)

        out = agg + bias
        if do_cut:
            # GCN_layer "cut": only the first `length` channels are aggregated
            # (and biased); the remaining channels pass the projection through
            # unchanged.  Masked select (free VPU) instead of slice + concat.
            out = jnp.where(col < length, out, h)
        if do_relu:
            out = jnp.maximum(out, 0.0)
        feats = out

    out_ref[...] = feats.astype(out_ref.dtype)


# ------------------------------- GCN forward ---------------------------------
def gcn_forward(params, features, adj_info, *, cut=0.33,
                ignore_touch_matrix=False):
    """Full GCN.forward: all layers fused into one Pallas kernel call.

    params   : list of (weight (1, Fin, Fout), bias (Fout,)) per layer
    features : (B, N, Fin)
    adj_info : dict with 'adj' / 'original' (N, N)
    """
    adj = adj_info['original'] if ignore_touch_matrix else adj_info['adj']
    B, N, Fin = features.shape
    num_layers = len(params)

    # Common padded channel width so weights/biases stack into single arrays.
    dims = [Fin] + [w.shape[-1] for (w, _) in params]
    fmax = max(dims)

    w_stack = jnp.zeros((num_layers, fmax, fmax), jnp.float32)
    b_stack = jnp.zeros((num_layers, 1, fmax), jnp.float32)
    layer_meta = []
    for i, (w, b) in enumerate(params):
        fin, fout = w.shape[-2], w.shape[-1]
        w_stack = w_stack.at[i, :fin, :fout].set(w.reshape(fin, fout))
        b_stack = b_stack.at[i, 0, :fout].set(b)
        is_last = (i == num_layers - 1)
        length = round(fout * cut)            # matches torch round(...)
        layer_meta.append((length, not is_last, not is_last))
    fout_last = params[-1][0].shape[-1]

    x2d = features.reshape(B * N, Fin).astype(jnp.float32)
    if Fin < fmax:
        x2d = jnp.pad(x2d, ((0, 0), (0, fmax - Fin)))

    # Block-diagonal adjacency: one aggregation matmul for the whole batch.
    adj_blk = jnp.kron(jnp.eye(B, dtype=jnp.float32), adj.astype(jnp.float32))

    kernel = functools.partial(_gcn_fused_kernel, layer_meta=tuple(layer_meta))
    vmem = functools.partial(pl.BlockSpec, memory_space=pltpu.MemorySpace.VMEM)

    out2d = pl.pallas_call(
        kernel,
        out_shape=jax.ShapeDtypeStruct((B * N, fmax), features.dtype),
        in_specs=[vmem(), vmem(), vmem(), vmem()],
        out_specs=vmem(),
    )(x2d, adj_blk, w_stack, b_stack)

    # TODO(synk): torch.isnan(...).any() + interactive input() debug hook has
    # no in-kernel equivalent; omitted.
    return out2d[:, :fout_last].reshape(B, N, fout_last)


# ------------------------------ parameter init --------------------------------
def init_gcn_params(key, input_features, num_layers, hidden_size):
    """Deterministic re-implementation of GCN.__init__ / GCN_layer.reset_parameters."""
    hidden_values = [input_features] + [hidden_size] * (num_layers - 1) + [3]
    params = []
    for i in range(num_layers):
        fin, fout = hidden_values[i], hidden_values[i + 1]
        key, kw, kb = jax.random.split(key, 3)
        stdv = 6.0 / math.sqrt(fin + 1) * 0.3
        w = jax.random.uniform(kw, (1, fin, fout), jnp.float32, -stdv, stdv)
        b = jax.random.uniform(kb, (fout,), jnp.float32, -0.05, 0.05)
        params.append((w, b))
    return params


# --------------------------- pure-JAX reference -------------------------------
def _ref_layer(features, adj, weight, bias, cut, do_cut, do_relu):
    h = jnp.matmul(features, weight)                # (B,N,Fout), weight broadcasts
    if do_cut:
        length = round(h.shape[-1] * cut)
        out = jnp.matmul(adj, h[:, :, :length])
        out = jnp.concatenate([out, h[:, :, length:]], axis=-1)
        out = out.at[:, :, :length].add(bias[:length])
    else:
        out = jnp.matmul(adj, h) + bias
    return jnp.maximum(out, 0.0) if do_relu else out


def _ref_forward(params, features, adj, cut):
    num_layers = len(params)
    for i, (w, b) in enumerate(params):
        is_last = (i == num_layers - 1)
        features = _ref_layer(features, adj, w, b, cut,
                              do_cut=not is_last, do_relu=not is_last)
    return features


# ---------------------------------- main --------------------------------------
if __name__ == "__main__":
    B, N = 2, 16                 # batch, number of mesh vertices
    input_features = 32
    hidden_size = 32
    num_layers = 3
    cut = 0.33

    key = jax.random.PRNGKey(0)
    key, kf, ka = jax.random.split(key, 3)

    features = jax.random.normal(kf, (B, N, input_features), jnp.float32)

    # symmetric row-normalized adjacency with self-loops (typical GCN input)
    a = jax.random.uniform(ka, (N, N), jnp.float32)
    a = (a + a.T) * 0.5 + jnp.eye(N, dtype=jnp.float32)
    adj = a / jnp.sum(a, axis=-1, keepdims=True)
    adj_info = {'adj': adj, 'original': adj}

    params = init_gcn_params(jax.random.PRNGKey(42),
                             input_features, num_layers, hidden_size)

    out = gcn_forward(params, features, adj_info, cut=cut)
    out = jax.block_until_ready(out)

    ref = _ref_forward(params, features, adj, cut)
    assert out.shape == (B, N, 3), out.shape
    err = float(jnp.max(jnp.abs(out - ref)))
    assert jnp.allclose(out, ref, atol=5e-5, rtol=5e-5), err

    print("KERNEL_OK")
</pallas_src>

<mosaic_0001>
module attributes {stable_mosaic.version = 11 : i64} {
  func.func @_gcn_fused_kernel(%arg0: memref<32x32xf32, #tpu.memory_space<vmem>>, %arg1: memref<32x32xf32, #tpu.memory_space<vmem>>, %arg2: memref<3x32x32xf32, #tpu.memory_space<vmem>>, %arg3: memref<3x1x32xf32, #tpu.memory_space<vmem>>, %arg4: memref<32x32xf32, #tpu.memory_space<vmem>>) attributes {dimension_semantics = [], scalar_prefetch = 0 : i64, scratch_operands = 0 : i64, tpu.core_type = #tpu.core_type<tc>} {
    %c0 = arith.constant 0 : index
    %c0_0 = arith.constant 0 : index
    %0 = vector.load %arg1[%c0, %c0_0] : memref<32x32xf32, #tpu.memory_space<vmem>>, vector<32x32xf32>
    %c0_1 = arith.constant 0 : index
    %c0_2 = arith.constant 0 : index
    %1 = vector.load %arg0[%c0_1, %c0_2] : memref<32x32xf32, #tpu.memory_space<vmem>>, vector<32x32xf32>
    %2 = tpu.iota {dimensions = array<i32: 1>} : vector<32x32xi32>
    %c0_3 = arith.constant 0 : index
    %c0_4 = arith.constant 0 : index
    %c0_5 = arith.constant 0 : index
    %3 = vector.load %arg2[%c0_3, %c0_4, %c0_5] : memref<3x32x32xf32, #tpu.memory_space<vmem>>, vector<1x32x32xf32>
    %4 = vector.shape_cast %3 : vector<1x32x32xf32> to vector<32x32xf32>
    %c0_6 = arith.constant 0 : index
    %c0_7 = arith.constant 0 : index
    %c0_8 = arith.constant 0 : index
    %5 = vector.load %arg3[%c0_6, %c0_7, %c0_8] : memref<3x1x32xf32, #tpu.memory_space<vmem>>, vector<1x1x32xf32>
    %6 = vector.shape_cast %5 : vector<1x1x32xf32> to vector<1x32xf32>
    %cst = arith.constant dense<0.000000e+00> : vector<32x32xf32>
    %7 = tpu.matmul %1, %4, %cst {dimension_numbers = #tpu.dot_dimension_numbers<[1], [0], [0], [1], [0, 0, 1, 1], [], []>} : vector<32x32xf32>, vector<32x32xf32>, vector<32x32xf32> -> vector<32x32xf32>
    %cst_9 = arith.constant dense<0.000000e+00> : vector<32x32xf32>
    %8 = tpu.matmul %0, %7, %cst_9 {dimension_numbers = #tpu.dot_dimension_numbers<[1], [0], [0], [1], [0, 0, 1, 1], [], []>} : vector<32x32xf32>, vector<32x32xf32>, vector<32x32xf32> -> vector<32x32xf32>
    %9 = vector.broadcast %6 : vector<1x32xf32> to vector<32x32xf32>
    %10 = arith.addf %8, %9 : vector<32x32xf32>
    %c11_i32 = arith.constant 11 : i32
    %11 = vector.broadcast %c11_i32 : i32 to vector<32x32xi32>
    %12 = arith.cmpi slt, %2, %11 : vector<32x32xi32>
    %13 = arith.select %12, %10, %7 : vector<32x32xi1>, vector<32x32xf32>
    %cst_10 = arith.constant 0.000000e+00 : f32
    %14 = vector.broadcast %cst_10 : f32 to vector<32x32xf32>
    %15 = arith.maximumf %13, %14 : vector<32x32xf32>
    %c1 = arith.constant 1 : index
    %c0_11 = arith.constant 0 : index
    %c0_12 = arith.constant 0 : index
    %16 = vector.load %arg2[%c1, %c0_11, %c0_12] : memref<3x32x32xf32, #tpu.memory_space<vmem>>, vector<1x32x32xf32>
    %17 = vector.shape_cast %16 : vector<1x32x32xf32> to vector<32x32xf32>
    %c1_13 = arith.constant 1 : index
    %c0_14 = arith.constant 0 : index
    %c0_15 = arith.constant 0 : index
    %18 = vector.load %arg3[%c1_13, %c0_14, %c0_15] : memref<3x1x32xf32, #tpu.memory_space<vmem>>, vector<1x1x32xf32>
    %19 = vector.shape_cast %18 : vector<1x1x32xf32> to vector<1x32xf32>
    %cst_16 = arith.constant dense<0.000000e+00> : vector<32x32xf32>
    %20 = tpu.matmul %15, %17, %cst_16 {dimension_numbers = #tpu.dot_dimension_numbers<[1], [0], [0], [1], [0, 0, 1, 1], [], []>} : vector<32x32xf32>, vector<32x32xf32>, vector<32x32xf32> -> vector<32x32xf32>
    %cst_17 = arith.constant dense<0.000000e+00> : vector<32x32xf32>
    %21 = tpu.matmul %0, %20, %cst_17 {dimension_numbers = #tpu.dot_dimension_numbers<[1], [0], [0], [1], [0, 0, 1, 1], [], []>} : vector<32x32xf32>, vector<32x32xf32>, vector<32x32xf32> -> vector<32x32xf32>
    %22 = vector.broadcast %19 : vector<1x32xf32> to vector<32x32xf32>
    %23 = arith.addf %21, %22 : vector<32x32xf32>
    %c11_i32_18 = arith.constant 11 : i32
    %24 = vector.broadcast %c11_i32_18 : i32 to vector<32x32xi32>
    %25 = arith.cmpi slt, %2, %24 : vector<32x32xi32>
    %26 = arith.select %25, %23, %20 : vector<32x32xi1>, vector<32x32xf32>
    %cst_19 = arith.constant 0.000000e+00 : f32
    %27 = vector.broadcast %cst_19 : f32 to vector<32x32xf32>
    %28 = arith.maximumf %26, %27 : vector<32x32xf32>
    %c2 = arith.constant 2 : index
    %c0_20 = arith.constant 0 : index
    %c0_21 = arith.constant 0 : index
    %29 = vector.load %arg2[%c2, %c0_20, %c0_21] : memref<3x32x32xf32, #tpu.memory_space<vmem>>, vector<1x32x32xf32>
    %30 = vector.shape_cast %29 : vector<1x32x32xf32> to vector<32x32xf32>
    %c2_22 = arith.constant 2 : index
    %c0_23 = arith.constant 0 : index
    %c0_24 = arith.constant 0 : index
    %31 = vector.load %arg3[%c2_22, %c0_23, %c0_24] : memref<3x1x32xf32, #tpu.memory_space<vmem>>, vector<1x1x32xf32>
    %32 = vector.shape_cast %31 : vector<1x1x32xf32> to vector<1x32xf32>
    %cst_25 = arith.constant dense<0.000000e+00> : vector<32x32xf32>
    %33 = tpu.matmul %28, %30, %cst_25 {dimension_numbers = #tpu.dot_dimension_numbers<[1], [0], [0], [1], [0, 0, 1, 1], [], []>} : vector<32x32xf32>, vector<32x32xf32>, vector<32x32xf32> -> vector<32x32xf32>
    %cst_26 = arith.constant dense<0.000000e+00> : vector<32x32xf32>
    %34 = tpu.matmul %0, %33, %cst_26 {dimension_numbers = #tpu.dot_dimension_numbers<[1], [0], [0], [1], [0, 0, 1, 1], [], []>} : vector<32x32xf32>, vector<32x32xf32>, vector<32x32xf32> -> vector<32x32xf32>
    %35 = vector.broadcast %32 : vector<1x32xf32> to vector<32x32xf32>
    %36 = arith.addf %34, %35 : vector<32x32xf32>
    %c0_27 = arith.constant 0 : index
    %c0_28 = arith.constant 0 : index
    %37 = vector.load %arg4[%c0_27, %c0_28] : memref<32x32xf32, #tpu.memory_space<vmem>>, vector<32x32xf32>
    tpu.vector_store %arg4[%c0_27, %c0_28], %36 {strides = array<i32>} : memref<32x32xf32, #tpu.memory_space<vmem>>, vector<32x32xf32>,
    return
  }
}

</mosaic_0001>

<llo_original>
// kernel: tpu_custom_call.1
$region0: #{tpu_custom_call.1}
  #allocation0 [shape = 'u32[]', space=smem, size = 0x4, offset = 0x4, fixed_abs, tag = 'smem constant byte address 0x4 - core index']
  #allocation1 [shape = 'u32[72,128]{1,0:T(1,128)}', space=vmem, size = 0x9000, scoped, tag = 'internal scratch']
  %s0 = inlined_call_operand.hbm [shape: f32[32,32], index: 0, kind: input, shape index: {}]
  %s1 = inlined_call_operand.hbm [shape: f32[32,32], index: 1, kind: input, shape index: {}]
  %s2 = inlined_call_operand.hbm [shape: f32[3,32,32], index: 2, kind: input, shape index: {}]
  %s3 = inlined_call_operand.hbm [shape: f32[3,1,32], index: 3, kind: input, shape index: {}]
  %s4 = inlined_call_operand.hbm [shape: f32[32,32], index: 4, kind: output, shape index: {}]
  %s5 = sld [smem:[#allocation0]]
  $region42: #{tpu_custom_call.1} parent=0
    _
  %s7 = ssub.s32 1, %s5
  %s8 = scalar_select 0, %s7, %s5
  $region1: #{tpu_custom_call.1} parent=0
    #allocation2 [shape = 'u8[16384]{0}', space=vmem, size = 0x4000, scoped, tag = 'input window, operand 0, single buffered']
    #allocation3 [shape = 's32[1]{0}', space=sflag, size = 0x4, scoped, tag = 'scoped memory for tpu_custom_call.1']
    #allocation4 [shape = 's32[1]{0}', space=sflag, size = 0x4, scoped, tag = 'scoped memory for tpu_custom_call.1']
    #allocation5 [shape = 'u8[16384]{0}', space=vmem, size = 0x4000, scoped, tag = 'input window, operand 1, single buffered']
    #allocation6 [shape = 's32[1]{0}', space=sflag, size = 0x4, scoped, tag = 'scoped memory for tpu_custom_call.1']
    #allocation7 [shape = 'u8[49152]{0}', space=vmem, size = 0xc000, scoped, tag = 'input window, operand 2, single buffered']
    #allocation8 [shape = 'u8[1536]{0}', space=vmem, size = 0x800, scoped, tag = 'input window, operand 3, single buffered']
    #allocation9 [shape = 's32[1]{0}', space=sflag, size = 0x4, scoped, tag = 'scoped memory for tpu_custom_call.1']
    #allocation10 [shape = 'u8[16384]{0}', space=vmem, size = 0x4000, scoped, tag = 'output window, operand 0, single buffered']
    %9 = vsyncpa [#allocation3], 0
    %10 = vsyncpa [#allocation6], 0
    %11 = vsyncpa [#allocation9], 0
    %12 = vsyncpa [#allocation4], 0
    // Predicated region
    $region2: #{tpu_custom_call.1} parent=1 // pred_check
      _
    $region3: #{tpu_custom_call.1} parent=1 // pred_check_branch
      %14 = sbr.rel (0) target = $region5
    $region4: #{tpu_custom_call.1} parent=1 // pred_region
      %16 = vsyncadd [#allocation3], 0
      %s17 = sshll.u32 %s0, 4
      %s18 = int_to_ptr.hbm [resolvable:$true] %s17
      %s19 = sshll.u32 [#allocation2], 4
      %s20 = int_to_ptr.vmem [resolvable:$true] %s19
      %25 = dma.hbm_to_vmem [thread:$0]  %s18, 512, %s20, [#allocation3], 128, 128, 8
    $region5: #{tpu_custom_call.1} parent=1 // pred_fallthru
      _
    // Predicated region
    $region6: #{tpu_custom_call.1} parent=1 // pred_check
      _
    $region7: #{tpu_custom_call.1} parent=1 // pred_check_branch
      %27 = sbr.rel (0) target = $region9
    $region8: #{tpu_custom_call.1} parent=1 // pred_region
      %29 = vsyncadd [#allocation6], 0
      %s30 = sshll.u32 %s1, 4
      %s31 = int_to_ptr.hbm [resolvable:$true] %s30
      %s32 = sshll.u32 [#allocation5], 4
      %s33 = int_to_ptr.vmem [resolvable:$true] %s32
      %38 = dma.hbm_to_vmem [thread:$0]  %s31, 512, %s33, [#allocation6], 128, 128, 8
    $region9: #{tpu_custom_call.1} parent=1 // pred_fallthru
      _
    // Predicated region
    $region10: #{tpu_custom_call.1} parent=1 // pred_check
      _
    $region11: #{tpu_custom_call.1} parent=1 // pred_check_branch
      %40 = sbr.rel (0) target = $region13
    $region12: #{tpu_custom_call.1} parent=1 // pred_region
      %42 = vsyncadd [#allocation6], 0
      %s43 = sshll.u32 %s2, 4
      %s44 = int_to_ptr.hbm [resolvable:$true] %s43
      %s45 = sshll.u32 [#allocation7], 4
      %s46 = int_to_ptr.vmem [resolvable:$true] %s45
      %51 = dma.hbm_to_vmem [thread:$0]  %s44, 1536, %s46, [#allocation6], 128, 128, 8
    $region13: #{tpu_custom_call.1} parent=1 // pred_fallthru
      _
    // Predicated region
    $region14: #{tpu_custom_call.1} parent=1 // pred_check
      _
    $region15: #{tpu_custom_call.1} parent=1 // pred_check_branch
      %53 = sbr.rel (0) target = $region17
    $region16: #{tpu_custom_call.1} parent=1 // pred_region
      %55 = vsyncadd [#allocation9], 0
      %s56 = sshll.u32 %s3, 4
      %s57 = int_to_ptr.hbm [resolvable:$true] %s56
      %s58 = sshll.u32 [#allocation8], 4
      %s59 = int_to_ptr.vmem [resolvable:$true] %s58
      %64 = dma.hbm_to_vmem [thread:$0]  %s57, 48, %s59, [#allocation9], 16, 16, 1
    $region17: #{tpu_custom_call.1} parent=1 // pred_fallthru
      _
    // Predicated region
    $region18: #{tpu_custom_call.1} parent=1 // pred_check
      _
    $region19: #{tpu_custom_call.1} parent=1 // pred_check_branch
      %66 = sbr.rel (0) target = $region21
    $region20: #{tpu_custom_call.1} parent=1 // pred_region
      %68 = dma.done [#allocation3], 512
    $region21: #{tpu_custom_call.1} parent=1 // pred_fallthru
      _
    // Predicated region
    $region22: #{tpu_custom_call.1} parent=1 // pred_check
      _
    $region23: #{tpu_custom_call.1} parent=1 // pred_check_branch
      %70 = sbr.rel (0) target = $region25
    $region24: #{tpu_custom_call.1} parent=1 // pred_region
      %72 = dma.done [#allocation6], 512
    $region25: #{tpu_custom_call.1} parent=1 // pred_fallthru
      _
    // Predicated region
    $region26: #{tpu_custom_call.1} parent=1 // pred_check
      _
    $region27: #{tpu_custom_call.1} parent=1 // pred_check_branch
      %74 = sbr.rel (0) target = $region29
    $region28: #{tpu_custom_call.1} parent=1 // pred_region
      %76 = dma.done [#allocation6], 1536
    $region29: #{tpu_custom_call.1} parent=1 // pred_fallthru
      _
    // Predicated region
    $region30: #{tpu_custom_call.1} parent=1 // pred_check
      _
    $region31: #{tpu_custom_call.1} parent=1 // pred_check_branch
      %78 = sbr.rel (0) target = $region33
    $region32: #{tpu_custom_call.1} parent=1 // pred_region
      %80 = dma.done [#allocation9], 48
    $region33: #{tpu_custom_call.1} parent=1 // pred_fallthru
      _
    %v81 = vld [vmem:[#allocation5] sm:$0xff]
    %v82 = vld [vmem:[#allocation5 + $0x8] sm:$0xff]
    %v83 = vld [vmem:[#allocation5 + $0x10] sm:$0xff]
    %v84 = vld [vmem:[#allocation5 + $0x18] sm:$0xff]
    %v85 = vld [vmem:[#allocation2] sm:$0xff]
    %v86 = vld [vmem:[#allocation2 + $0x8] sm:$0xff]
    %v87 = vld [vmem:[#allocation2 + $0x10] sm:$0xff]
    %v88 = vld [vmem:[#allocation2 + $0x18] sm:$0xff]
    %v89 = vlaneseq
    %v90 = vand.u32 %v89, 127
    %v91 = vld [vmem:[#allocation7] sm:$0xff]
    %v92 = vld [vmem:[#allocation7 + $0x8] sm:$0xff]
    %v93 = vld [vmem:[#allocation7 + $0x10] sm:$0xff]
    %v94 = vld [vmem:[#allocation7 + $0x18] sm:$0xff]
    %v95 = vld [vmem:[#allocation8] sm:$0x1]
    %vm96 = vcmask 261120
    %v98 = vsel %vm96, %v85, 0
    %v101 = vsel %vm96, %v86, 0
    %v104 = vsel %vm96, %v87, 0
    %v107 = vsel %vm96, %v88, 0
    %109 = vmatpush.msra.mxu0 0.0
    %110 = vmatpush.msra.mxu0 0.0
    %111 = vmatpush.msra.mxu0 0.0
    %112 = vmatpush.msra.mxu0 0.0
    %113 = vmatpush.msra.mxu0 0.0
    %114 = vmatpush.msra.mxu0 0.0
    %115 = vmatpush.msra.mxu0 0.0
    %116 = vmatpush.msra.mxu0 0.0
    %117 = vmatpush.msra.mxu0 0.0
    %118 = vmatpush.msra.mxu0 0.0
    %119 = vmatpush.msra.mxu0 0.0
    %120 = vmatpush.msra.mxu0 0.0
    %121 = vmatpush.msra.mxu0 %v94
    %122 = vmatpush.msra.mxu0 %v93
    %123 = vmatpush.msra.mxu0 %v92
    %124 = vmatpush.msra.mxu0 %v91
    %125 = vmatmul.f32.gmra.mxu0 %v98
    %v126 = vpop.f32.mrf.mxu0
    %v127 = vadd.f32 0.0, %v126
    %128 = vmatmul.f32.gmra.mxu0 %v101
    %v129 = vpop.f32.mrf.mxu0
    %v130 = vadd.f32 0.0, %v129
    %131 = vmatmul.f32.gmra.mxu0 %v104
    %v132 = vpop.f32.mrf.mxu0
    %v133 = vadd.f32 0.0, %v132
    %134 = vmatmul.f32.gmra.mxu0 %v107
    %v135 = vpop.f32.mrf.mxu0
    %v136 = vadd.f32 0.0, %v135
    %137 = vdwg.mxu0
    %v139 = vperm.slane %v95, 0
    %v142 = vsel %vm96, %v81, 0
    %v145 = vsel %vm96, %v82, 0
    %v148 = vsel %vm96, %v83, 0
    %v151 = vsel %vm96, %v84, 0
    %153 = vmatpush.msra.mxu0 0.0
    %154 = vmatpush.msra.mxu0 0.0
    %155 = vmatpush.msra.mxu0 0.0
    %156 = vmatpush.msra.mxu0 0.0
    %157 = vmatpush.msra.mxu0 0.0
    %158 = vmatpush.msra.mxu0 0.0
    %159 = vmatpush.msra.mxu0 0.0
    %160 = vmatpush.msra.mxu0 0.0
    %161 = vmatpush.msra.mxu0 0.0
    %162 = vmatpush.msra.mxu0 0.0
    %163 = vmatpush.msra.mxu0 0.0
    %164 = vmatpush.msra.mxu0 0.0
    %165 = vmatpush.msra.mxu0 %v136
    %166 = vmatpush.msra.mxu0 %v133
    %167 = vmatpush.msra.mxu0 %v130
    %168 = vmatpush.msra.mxu0 %v127
    %169 = vmatmul.f32.gmra.mxu0 %v142
    %v170 = vpop.f32.mrf.mxu0
    %v171 = vadd.f32 %v139, %v170
    %172 = vmatmul.f32.gmra.mxu0 %v145
    %v173 = vpop.f32.mrf.mxu0
    %v174 = vadd.f32 %v139, %v173
    %175 = vmatmul.f32.gmra.mxu0 %v148
    %v176 = vpop.f32.mrf.mxu0
    %v177 = vadd.f32 %v139, %v176
    %178 = vmatmul.f32.gmra.mxu0 %v151
    %v179 = vpop.f32.mrf.mxu0
    %v180 = vadd.f32 %v139, %v179
    %181 = vdwg.mxu0
    %vm182 = vcmp.lt.s32.totalorder %v90, 11
    %v183 = vsel %vm182, %v171, %v127
    %v184 = vsel %vm182, %v174, %v130
    %v185 = vsel %vm182, %v177, %v133
    %v186 = vsel %vm182, %v180, %v136
    %v187 = vmax.f32 %v183, 0.0
    %v188 = vmax.f32 %v184, 0.0
    %v189 = vmax.f32 %v185, 0.0
    %v190 = vmax.f32 %v186, 0.0
    %s191 = scalar_lea.vmem [#allocation7], 32
    %v192 = vld [vmem:[%s191] sm:$0xff]
    %v193 = vld [vmem:[%s191 + $0x8] sm:$0xff]
    %v194 = vld [vmem:[%s191 + $0x10] sm:$0xff]
    %v195 = vld [vmem:[%s191 + $0x18] sm:$0xff]
    %s196 = scalar_lea.vmem [#allocation8], 1
    %v197 = vld [vmem:[%s196] sm:$0x1]
    %v199 = vsel %vm96, %v187, 0
    %v202 = vsel %vm96, %v188, 0
    %v205 = vsel %vm96, %v189, 0
    %v208 = vsel %vm96, %v190, 0
    %210 = vmatpush.msra.mxu0 0.0
    %211 = vmatpush.msra.mxu0 0.0
    %212 = vmatpush.msra.mxu0 0.0
    %213 = vmatpush.msra.mxu0 0.0
    %214 = vmatpush.msra.mxu0 0.0
    %215 = vmatpush.msra.mxu0 0.0
    %216 = vmatpush.msra.mxu0 0.0
    %217 = vmatpush.msra.mxu0 0.0
    %218 = vmatpush.msra.mxu0 0.0
    %219 = vmatpush.msra.mxu0 0.0
    %220 = vmatpush.msra.mxu0 0.0
    %221 = vmatpush.msra.mxu0 0.0
    %222 = vmatpush.msra.mxu0 %v195
    %223 = vmatpush.msra.mxu0 %v194
    %224 = vmatpush.msra.mxu0 %v193
    %225 = vmatpush.msra.mxu0 %v192
    %226 = vmatmul.f32.gmra.mxu0 %v199
    %v227 = vpop.f32.mrf.mxu0
    %v228 = vadd.f32 0.0, %v227
    %229 = vmatmul.f32.gmra.mxu0 %v202
    %v230 = vpop.f32.mrf.mxu0
    %v231 = vadd.f32 0.0, %v230
    %232 = vmatmul.f32.gmra.mxu0 %v205
    %v233 = vpop.f32.mrf.mxu0
    %v234 = vadd.f32 0.0, %v233
    %235 = vmatmul.f32.gmra.mxu0 %v208
    %v236 = vpop.f32.mrf.mxu0
    %v237 = vadd.f32 0.0, %v236
    %238 = vdwg.mxu0
    %v240 = vperm.slane %v197, 0
    %242 = vmatpush.msra.mxu0 0.0
    %243 = vmatpush.msra.mxu0 0.0
    %244 = vmatpush.msra.mxu0 0.0
    %245 = vmatpush.msra.mxu0 0.0
    %246 = vmatpush.msra.mxu0 0.0
    %247 = vmatpush.msra.mxu0 0.0
    %248 = vmatpush.msra.mxu0 0.0
    %249 = vmatpush.msra.mxu0 0.0
    %250 = vmatpush.msra.mxu0 0.0
    %251 = vmatpush.msra.mxu0 0.0
    %252 = vmatpush.msra.mxu0 0.0
    %253 = vmatpush.msra.mxu0 0.0
    %254 = vmatpush.msra.mxu0 %v237
    %255 = vmatpush.msra.mxu0 %v234
    %256 = vmatpush.msra.mxu0 %v231
    %257 = vmatpush.msra.mxu0 %v228
    %258 = vmatmul.f32.gmra.mxu0 %v142
    %v259 = vpop.f32.mrf.mxu0
    %v260 = vadd.f32 %v240, %v259
    %261 = vmatmul.f32.gmra.mxu0 %v145
    %v262 = vpop.f32.mrf.mxu0
    %v263 = vadd.f32 %v240, %v262
    %264 = vmatmul.f32.gmra.mxu0 %v148
    %v265 = vpop.f32.mrf.mxu0
    %v266 = vadd.f32 %v240, %v265
    %267 = vmatmul.f32.gmra.mxu0 %v151
    %v268 = vpop.f32.mrf.mxu0
    %v269 = vadd.f32 %v240, %v268
    %270 = vdwg.mxu0
    %v271 = vsel %vm182, %v260, %v228
    %v272 = vsel %vm182, %v263, %v231
    %v273 = vsel %vm182, %v266, %v234
    %v274 = vsel %vm182, %v269, %v237
    %v275 = vmax.f32 %v271, 0.0
    %v276 = vmax.f32 %v272, 0.0
    %v277 = vmax.f32 %v273, 0.0
    %v278 = vmax.f32 %v274, 0.0
    %s279 = scalar_lea.vmem [#allocation7], 64
    %v280 = vld [vmem:[%s279] sm:$0xff]
    %v281 = vld [vmem:[%s279 + $0x8] sm:$0xff]
    %v282 = vld [vmem:[%s279 + $0x10] sm:$0xff]
    %v283 = vld [vmem:[%s279 + $0x18] sm:$0xff]
    %s284 = scalar_lea.vmem [#allocation8], 2
    %v285 = vld [vmem:[%s284] sm:$0x1]
    %v287 = vsel %vm96, %v275, 0
    %v290 = vsel %vm96, %v276, 0
    %v293 = vsel %vm96, %v277, 0
    %v296 = vsel %vm96, %v278, 0
    %298 = vmatpush.msra.mxu0 0.0
    %299 = vmatpush.msra.mxu0 0.0
    %300 = vmatpush.msra.mxu0 0.0
    %301 = vmatpush.msra.mxu0 0.0
    %302 = vmatpush.msra.mxu0 0.0
    %303 = vmatpush.msra.mxu0 0.0
    %304 = vmatpush.msra.mxu0 0.0
    %305 = vmatpush.msra.mxu0 0.0
    %306 = vmatpush.msra.mxu0 0.0
    %307 = vmatpush.msra.mxu0 0.0
    %308 = vmatpush.msra.mxu0 0.0
    %309 = vmatpush.msra.mxu0 0.0
    %310 = vmatpush.msra.mxu0 %v283
    %311 = vmatpush.msra.mxu0 %v282
    %312 = vmatpush.msra.mxu0 %v281
    %313 = vmatpush.msra.mxu0 %v280
    %314 = vmatmul.f32.gmra.mxu0 %v287
    %v315 = vpop.f32.mrf.mxu0
    %v316 = vadd.f32 0.0, %v315
    %317 = vmatmul.f32.gmra.mxu0 %v290
    %v318 = vpop.f32.mrf.mxu0
    %v319 = vadd.f32 0.0, %v318
    %320 = vmatmul.f32.gmra.mxu0 %v293
    %v321 = vpop.f32.mrf.mxu0
    %v322 = vadd.f32 0.0, %v321
    %323 = vmatmul.f32.gmra.mxu0 %v296
    %v324 = vpop.f32.mrf.mxu0
    %v325 = vadd.f32 0.0, %v324
    %326 = vdwg.mxu0
    %v328 = vperm.slane %v285, 0
    %330 = vmatpush.msra.mxu0 0.0
    %331 = vmatpush.msra.mxu0 0.0
    %332 = vmatpush.msra.mxu0 0.0
    %333 = vmatpush.msra.mxu0 0.0
    %334 = vmatpush.msra.mxu0 0.0
    %335 = vmatpush.msra.mxu0 0.0
    %336 = vmatpush.msra.mxu0 0.0
    %337 = vmatpush.msra.mxu0 0.0
    %338 = vmatpush.msra.mxu0 0.0
    %339 = vmatpush.msra.mxu0 0.0
    %340 = vmatpush.msra.mxu0 0.0
    %341 = vmatpush.msra.mxu0 0.0
    %342 = vmatpush.msra.mxu0 %v325
    %343 = vmatpush.msra.mxu0 %v322
    %344 = vmatpush.msra.mxu0 %v319
    %345 = vmatpush.msra.mxu0 %v316
    %346 = vmatmul.f32.gmra.mxu0 %v142
    %v347 = vpop.f32.mrf.mxu0
    %v348 = vadd.f32 %v328, %v347
    %349 = vmatmul.f32.gmra.mxu0 %v145
    %v350 = vpop.f32.mrf.mxu0
    %v351 = vadd.f32 %v328, %v350
    %352 = vmatmul.f32.gmra.mxu0 %v148
    %v353 = vpop.f32.mrf.mxu0
    %v354 = vadd.f32 %v328, %v353
    %355 = vmatmul.f32.gmra.mxu0 %v151
    %v356 = vpop.f32.mrf.mxu0
    %v357 = vadd.f32 %v328, %v356
    %358 = vdwg.mxu0
    %359 = vst.msk [vmem:[#allocation10] sm:$0xff] %vm96, %v348
    %360 = vst.msk [vmem:[#allocation10 + $0x8] sm:$0xff] %vm96, %v351
    %361 = vst.msk [vmem:[#allocation10 + $0x10] sm:$0xff] %vm96, %v354
    %362 = vst.msk [vmem:[#allocation10 + $0x18] sm:$0xff] %vm96, %v357
    // Predicated region
    $region34: #{tpu_custom_call.1} parent=1 // pred_check
      _
    $region35: #{tpu_custom_call.1} parent=1 // pred_check_branch
      %364 = sbr.rel (0) target = $region37
    $region36: #{tpu_custom_call.1} parent=1 // pred_region
      %366 = vsyncadd [#allocation4], 0
      %s367 = sshll.u32 [#allocation10], 4
      %s368 = int_to_ptr.vmem [resolvable:$true] %s367
      %s369 = sshll.u32 %s4, 4
      %s370 = int_to_ptr.hbm [resolvable:$true] %s369
      %375 = dma.vmem_to_hbm [thread:$0]  %s368, 512, %s370, [#allocation4], 128, 128, 8
    $region37: #{tpu_custom_call.1} parent=1 // pred_fallthru
      _
    // Predicated region
    $region38: #{tpu_custom_call.1} parent=1 // pred_check
      _
    $region39: #{tpu_custom_call.1} parent=1 // pred_check_branch
      %377 = sbr.rel (0) target = $region41
    $region40: #{tpu_custom_call.1} parent=1 // pred_region
      %379 = dma.done [#allocation4], 512
    $region41: #{tpu_custom_call.1} parent=1 // pred_fallthru
      _
    %380 = vsyncpa [#allocation3], 1
    %381 = vsyncpa [#allocation6], 1
    %382 = vsyncpa [#allocation9], 1
    %383 = vsyncpa [#allocation4], 1

</llo_original>
